<compile_context>
chip_gen: v7x
topology: tpu7x:2x2x1
jax: 0.10.0
libtpu: 0.0.40
codegen_flags: <defaults>
</compile_context>

<pallas_src>
import functools

import jax
import jax.numpy as jnp
from jax import lax
from jax.experimental import pallas as pl
from jax.experimental.pallas import tpu as pltpu


# ---------------------------------------------------------------------------
# Prologue: xfT[b, :, i] = Wf^T x[b, i, :]  (no bf -- it cancels in the softmax
# over i).  Stored channel-major (B, c8, N) so the main kernel streams
# lane-dense (c8, bk) blocks and the score matmul needs no transposed operand.
# ---------------------------------------------------------------------------
def _project_f_kernel(x_ref, wfT_ref, o_ref):
    x_blk = x_ref[0].astype(wfT_ref.dtype)                         # (bk, C)
    xfT = lax.dot_general(wfT_ref[...], x_blk,                     # (c8, bk)
                          dimension_numbers=(((1,), (1,)), ((), ())),
                          preferred_element_type=jnp.float32)
    o_ref[0] = xfT.astype(o_ref.dtype)


def _project_f(x_bnc, wfT, *, block_k, out_dtype):
    B, N, C = x_bnc.shape
    c8 = wfT.shape[0]
    bk = min(block_k, N)
    return pl.pallas_call(
        _project_f_kernel,
        out_shape=jax.ShapeDtypeStruct((B, c8, N), out_dtype),
        grid_spec=pltpu.PrefetchScalarGridSpec(
            num_scalar_prefetch=0,
            grid=(B, N // bk),
            in_specs=[
                pl.BlockSpec((1, bk, C), lambda b, j: (b, j, 0)),
                pl.BlockSpec((c8, C), lambda b, j: (0, 0)),
            ],
            out_specs=pl.BlockSpec((1, c8, bk), lambda b, j: (b, 0, j)),
        ),
        compiler_params=pltpu.CompilerParams(
            dimension_semantics=("parallel", "parallel"),
            vmem_limit_bytes=32 * 1024 * 1024,
        ),
    )(x_bnc, wfT)


# ---------------------------------------------------------------------------
# Main kernel.  Grid = (batch, output-row block n, reduction-row block k).
# ---------------------------------------------------------------------------
def _self_attention_kernel(x_out_ref, xf_ref, w3_ref, b3_ref, wv_ref, bv_ref,
                           o_ref, g_scr, h_scr, d_scr, m_scr, l_scr, *, c8):
    """x_out_ref : (1, bn, C)  rows whose outputs this (b, n) pair produces
    (resident over k); xf_ref : (1, c8, bk) precomputed f-projection of the
    softmax-normalization rows i (streamed over k)."""
    kb = pl.program_id(2)
    n_kb = pl.num_programs(2)
    cdt = w3_ref.dtype  # matmul compute dtype (f32 or bf16); accumulation is f32

    # ---- once per output block: fused f|g|h projection of the output rows ----
    @pl.when(kb == 0)
    def _init():
        x_o = x_out_ref[0]                                             # (bn, C) f32
        proj = jnp.dot(x_o.astype(cdt), w3_ref[...],
                       preferred_element_type=jnp.float32) + b3_ref[...]
        f_o = proj[:, :c8]            # bias slice for f is zero (bf cancels)
        g_o = proj[:, c8:2 * c8]
        h_o = proj[:, 2 * c8:]
        g_scr[...] = g_o.astype(g_scr.dtype)
        h_scr[...] = h_o
        # diagonal of S never needs the full score matrix: S[n,n] = <f_n, g_n>
        d_scr[...] = jnp.sum(f_o * g_o, axis=1, keepdims=True)
        m_scr[...] = jnp.full(m_scr.shape, -jnp.inf, dtype=m_scr.dtype)
        l_scr[...] = jnp.zeros(l_scr.shape, dtype=l_scr.dtype)

    # ---- every step: online softmax statistics (no projection work here) -----
    # t[q, r] = <g_q, f_r> == S[i=r, k=q]; MXU-native [bn,c8] x [c8,bk].
    t = jnp.dot(g_scr[...], xf_ref[0], preferred_element_type=jnp.float32)
    m_prev = m_scr[...]
    m_new = jnp.maximum(m_prev, jnp.max(t, axis=1, keepdims=True))     # (bn, 1)
    alpha = jnp.exp(m_prev - m_new)
    l_scr[...] = l_scr[...] * alpha + jnp.sum(jnp.exp(t - m_new), axis=1,
                                              keepdims=True)
    m_scr[...] = m_new

    # ---- last reduction step: softmax diagonal, v-projection, residual -------
    @pl.when(kb == n_kb - 1)
    def _finalize():
        diag_a = jnp.exp(d_scr[...] - m_scr[...]) * pl.reciprocal(l_scr[...],
                                                                  approx=True)
        att = (h_scr[...] * diag_a).astype(cdt)                        # (bn, c8)
        y = jnp.dot(att, wv_ref[...],
                    preferred_element_type=jnp.float32) + bv_ref[...]  # (bn, C)
        o_ref[0] = (x_out_ref[0] + y).astype(o_ref.dtype)


def self_attention_pallas(x_nchw, params, *, block_n=256, block_k=512,
                          compute_dtype=jnp.float32):
    """x_nchw: (B, C, H, W) float32.  params: dict of 1x1-conv weights/biases."""
    B, C, H, W = x_nchw.shape
    N = H * W
    c8 = params["wf"].shape[1]

    # NCHW -> (B, N, C): channels last -> TPU lanes
    x_bnc = jnp.transpose(x_nchw, (0, 2, 3, 1)).reshape(B, N, C)

    bn = min(block_n, N)
    bk = min(block_k, N)
    assert N % bn == 0 and N % bk == 0, "block sizes must tile N = H*W"
    assert (bn % 8 == 0 or bn == N) and (bk % 8 == 0 or bk == N)

    cdt = compute_dtype
    # Fused f|g|h projection weight for the output-row block; bf slice of the
    # bias is zeroed (it cancels in the softmax over i).
    w3 = jnp.concatenate([params["wf"], params["wg"], params["wh"]],
                         axis=1).astype(cdt)
    b3 = jnp.concatenate([jnp.zeros_like(params["bf"]), params["bg"],
                          params["bh"]]).reshape(1, 3 * c8).astype(jnp.float32)
    wfT = jnp.transpose(params["wf"]).astype(cdt)                  # (c8, C)
    wv = params["wv"].astype(cdt)
    bv = params["bv"].reshape(1, C).astype(jnp.float32)

    # Hoisted reduction-side projection: computed once per batch, streamed as
    # lane-dense (c8, bk) blocks (bf16 in the bf16 path -> half the HBM bytes).
    xfT = _project_f(x_bnc, wfT, block_k=bk, out_dtype=cdt)        # (B, c8, N)

    # Note (v7x): keep B * (N // bn) >= 2 so both TensorCores get parallel work.
    grid = (B, N // bn, N // bk)
    wspec = lambda shape: pl.BlockSpec(shape, lambda b, n, k: (0, 0))

    kernel = pl.pallas_call(
        functools.partial(_self_attention_kernel, c8=c8),
        out_shape=jax.ShapeDtypeStruct((B, N, C), x_bnc.dtype),
        grid_spec=pltpu.PrefetchScalarGridSpec(
            num_scalar_prefetch=0,
            grid=grid,
            in_specs=[
                pl.BlockSpec((1, bn, C), lambda b, n, k: (b, n, 0)),   # x (output rows)
                pl.BlockSpec((1, c8, bk), lambda b, n, k: (b, 0, k)),  # xfT (streamed)
                wspec((C, 3 * c8)),                                    # fused Wf|Wg|Wh
                wspec((1, 3 * c8)),                                    # fused bias [0|bg|bh]
                wspec((c8, C)),                                        # Wv
                wspec((1, C)),                                         # bv
            ],
            out_specs=pl.BlockSpec((1, bn, C), lambda b, n, k: (b, n, 0)),
            scratch_shapes=[
                pltpu.VMEM((bn, c8), cdt),           # xg of output rows (score operand)
                pltpu.VMEM((bn, c8), jnp.float32),   # xh of output rows
                pltpu.VMEM((bn, 1), jnp.float32),    # diagonal scores S[n,n]
                pltpu.VMEM((bn, 1), jnp.float32),    # running max over i
                pltpu.VMEM((bn, 1), jnp.float32),    # running sum of exp over i
            ],
        ),
        compiler_params=pltpu.CompilerParams(
            dimension_semantics=("parallel", "parallel", "arbitrary"),
            vmem_limit_bytes=32 * 1024 * 1024,   # safe on v5e/v6e (128 MiB) and v7x (64 MiB)
        ),
    )
    out_bnc = kernel(x_bnc, xfT, w3, b3, wv, bv)
    # (B, N, C) -> NCHW
    return jnp.transpose(out_bnc.reshape(B, H, W, C), (0, 3, 1, 2))


def self_attention_ref(x_nchw, params):
    """Pure-JAX reference matching the PyTorch module exactly (incl. diagonal einsum)."""
    B, C, H, W = x_nchw.shape
    N = H * W
    xc = x_nchw.reshape(B, C, N)                                   # (B, C, N)

    def conv1x1(x, w_t, b):  # w_t: (C_in, C_out)
        return jnp.einsum('co,bcn->bon', w_t, x) + b[None, :, None]

    f = conv1x1(xc, params["wf"], params["bf"])                    # (B, c8, N)
    g = conv1x1(xc, params["wg"], params["bg"])                    # (B, c8, N)
    h = conv1x1(xc, params["wh"], params["bh"])                    # (B, c8, N)

    f_r = jnp.transpose(f, (0, 2, 1))                              # (B, N, c8)
    s = jnp.einsum('bij,bjk->bik', f_r, g)                         # (B, N, N)
    a = jax.nn.softmax(s, axis=1)                                  # softmax over dim=1
    diag_a = jnp.diagonal(a, axis1=1, axis2=2)                     # (B, N)  <- 'bcn,bnn->bcn'
    att = h * diag_a[:, None, :]                                   # (B, c8, N)
    v = jnp.einsum('co,bcn->bon', params["wv"], att) + params["bv"][None, :, None]
    return x_nchw + v.reshape(B, C, H, W)


def make_params(key, in_channels):
    c8 = in_channels // 8
    ks = jax.random.split(key, 8)
    s_in = 1.0 / jnp.sqrt(in_channels)
    s_c8 = 1.0 / jnp.sqrt(c8)
    # Stored already transposed as (C_in, C_out) for the matmul formulation.
    return {
        "wf": jax.random.uniform(ks[0], (in_channels, c8), jnp.float32, -s_in, s_in),
        "bf": jax.random.uniform(ks[1], (c8,), jnp.float32, -s_in, s_in),
        "wg": jax.random.uniform(ks[2], (in_channels, c8), jnp.float32, -s_in, s_in),
        "bg": jax.random.uniform(ks[3], (c8,), jnp.float32, -s_in, s_in),
        "wh": jax.random.uniform(ks[4], (in_channels, c8), jnp.float32, -s_in, s_in),
        "bh": jax.random.uniform(ks[5], (c8,), jnp.float32, -s_in, s_in),
        "wv": jax.random.uniform(ks[6], (c8, in_channels), jnp.float32, -s_c8, s_c8),
        "bv": jax.random.uniform(ks[7], (in_channels,), jnp.float32, -s_c8, s_c8),
    }


if __name__ == "__main__":
    key = jax.random.PRNGKey(0)
    k_x, k_p = jax.random.split(key)

    # in_channels=64 -> inner channels 64//8 = 8; N = 16*16 = 256
    B, C, H, W = 2, 64, 16, 16
    x = jax.random.normal(k_x, (B, C, H, W), jnp.float32)
    params = make_params(k_p, C)

    ref = self_attention_ref(x, params)

    # f32 MXU path: tight check of the flash-streamed softmax statistics.
    out_f32 = jax.block_until_ready(
        self_attention_pallas(x, params, block_n=256, block_k=512,
                              compute_dtype=jnp.float32))
    assert out_f32.shape == (B, C, H, W)
    assert jnp.allclose(out_f32, ref, atol=5e-3, rtol=5e-3), "f32 Pallas kernel mismatch"

    # bf16 MXU operands (f32 accumulation + f32 softmax stats): loose sanity check.
    out_bf16 = jax.block_until_ready(
        self_attention_pallas(x, params, block_n=256, block_k=512,
                              compute_dtype=jnp.bfloat16))
    assert out_bf16.shape == (B, C, H, W)
    assert jnp.allclose(out_bf16, ref, atol=1e-1, rtol=1e-1), "bf16 Pallas kernel mismatch"

    print("KERNEL_OK")
</pallas_src>

<mosaic_0001>
module attributes {stable_mosaic.version = 11 : i64} {
  func.func @_project_f_kernel(%arg0: i32, %arg1: i32, %arg2: memref<1x256x64xf32, #tpu.memory_space<vmem>>, %arg3: memref<8x64xf32, #tpu.memory_space<vmem>>, %arg4: memref<1x8x256xf32, #tpu.memory_space<vmem>>) attributes {dimension_semantics = [#tpu.dimension_semantics<parallel>, #tpu.dimension_semantics<parallel>], iteration_bounds = array<i64: 2, 1>, scalar_prefetch = 0 : i64, scratch_operands = 0 : i64, tpu.core_type = #tpu.core_type<tc>, window_params = [{transform_indices = @transform_0, window_bounds = array<i64: 1, 256, 64>}, {pipeline_mode = #tpu.pipeline_mode<synchronous>, transform_indices = @transform_1, window_bounds = array<i64: 8, 64>}, {transform_indices = @transform_2, window_bounds = array<i64: 1, 8, 256>}]} {
    %c0 = arith.constant 0 : index
    %c0_0 = arith.constant 0 : index
    %c0_1 = arith.constant 0 : index
    %0 = vector.load %arg2[%c0, %c0_0, %c0_1] : memref<1x256x64xf32, #tpu.memory_space<vmem>>, vector<1x256x64xf32>
    %1 = vector.shape_cast %0 : vector<1x256x64xf32> to vector<256x64xf32>
    %c0_2 = arith.constant 0 : index
    %c0_3 = arith.constant 0 : index
    %2 = vector.load %arg3[%c0_2, %c0_3] : memref<8x64xf32, #tpu.memory_space<vmem>>, vector<8x64xf32>
    %cst = arith.constant dense<0.000000e+00> : vector<8x256xf32>
    %3 = tpu.matmul %2, %1, %cst {dimension_numbers = #tpu.dot_dimension_numbers<[1], [1], [0], [0], [0, 0, 1, 0], [], []>} : vector<8x64xf32>, vector<256x64xf32>, vector<8x256xf32> -> vector<8x256xf32>
    %c0_4 = arith.constant 0 : index
    %c0_5 = arith.constant 0 : index
    %c0_6 = arith.constant 0 : index
    %4 = vector.load %arg4[%c0_4, %c0_5, %c0_6] : memref<1x8x256xf32, #tpu.memory_space<vmem>>, vector<1x8x256xf32>
    %5 = vector.shape_cast %4 : vector<1x8x256xf32> to vector<8x256xf32>
    %6 = vector.shape_cast %3 : vector<8x256xf32> to vector<1x8x256xf32>
    tpu.vector_store %arg4[%c0_4, %c0_5, %c0_6], %6 {strides = array<i32>} : memref<1x8x256xf32, #tpu.memory_space<vmem>>, vector<1x8x256xf32>,
    return
  }
  func.func @transform_0(%arg0: i32, %arg1: i32) -> (i32, i32, i32) {
    %c0_i32 = arith.constant 0 : i32
    %c0_i32_0 = arith.constant 0 : i32
    return %arg0, %arg1, %c0_i32 : i32, i32, i32
  }
  func.func @transform_1(%arg0: i32, %arg1: i32) -> (i32, i32) {
    %c0_i32 = arith.constant 0 : i32
    %c0_i32_0 = arith.constant 0 : i32
    %c0_i32_1 = arith.constant 0 : i32
    return %c0_i32, %c0_i32_0 : i32, i32
  }
  func.func @transform_2(%arg0: i32, %arg1: i32) -> (i32, i32, i32) {
    %c0_i32 = arith.constant 0 : i32
    %c0_i32_0 = arith.constant 0 : i32
    return %arg0, %c0_i32, %arg1 : i32, i32, i32
  }
}

</mosaic_0001>

<llo_original>
// kernel: tpu_custom_call.1
$region0: #{tpu_custom_call.1}
  #allocation0 [shape = 'u32[]', space=smem, size = 0x4, offset = 0x4, fixed_abs, tag = 'smem constant byte address 0x4 - core index']
  #allocation1 [shape = 'u32[144,128]{1,0:T(1,128)}', space=vmem, size = 0x12000, scoped, tag = 'internal scratch']
  %s0 = inlined_call_operand.vmem [shape: f32[2,256,64], index: 0, kind: input, shape index: {}]
  %s1 = inlined_call_operand.vmem [shape: f32[8,64], index: 1, kind: input, shape index: {}]
  %s2 = inlined_call_operand.hbm [shape: f32[2,8,256], index: 2, kind: output, shape index: {}]
  %s3 = sld [smem:[#allocation0]]
  $region41: #{tpu_custom_call.1} parent=0
    _
  %s5 = ssub.s32 1, %s3
  %s6 = scalar_select 0, %s5, %s3
  $region1: #{tpu_custom_call.1} parent=0
    #allocation2 [shape = 'u8[16384]{0}', space=vmem, size = 0x4000, scoped, tag = 'output window, operand 0']
    #allocation3 [shape = 's32[2]{0}', space=sflag, size = 0x8, scoped, tag = 'scoped memory for tpu_custom_call.1']
    %7 = vsyncpa [#allocation3], 0
    %s8 = scalar_lea.sflag [#allocation3], 1
    %9 = vsyncpa %s8, 0
    loop: start=0, step=1, limit=4
    $region2: #{tpu_custom_call.1} parent=1 // loop_pre_header
      _
    $region3: #{tpu_custom_call.1} parent=1 // loop_header
      %s11 = sphi 0, %s15
      %p12 = scmp.ge.s32.totalorder %s11, 4
      %s18 = sphi 0, %s30
      %s19 = sphi 0, %s26
      %s20 = sphi 0, %s18
      %s21 = sphi 0, %s19
      %s22 = sphi 0, %s20
      %s23 = sphi 0, %s21
      %s35 = sphi 0, %s37
      %s38 = sphi 0, %s35
      %s39 = sphi 0, %s38
      %s55 = sphi 0, %s39
      %s59 = sphi 0, %s59
      %s61 = sphi 0, %s59
      %s62 = sphi 0, %s61
      %s76 = sphi 0, %s62
      %s84 = sphi 0, %s86
      %s87 = sphi 0, %s84
      %s88 = sphi 0, %s87
      %s104 = sphi 0, %s88
    $region4: #{tpu_custom_call.1} parent=1 // loop_header_branch
      %14 = sbr.rel (%p12) target = $region8
    $region5: #{tpu_custom_call.1} parent=1 // loop_body
      %s16 = ssub.s32 %s11, 1
      %s17 = ssub.s32 %s11, 2
      %s24 = sadd.s32 1, %s19
      %p25 = scmp.ge.s32.totalorder %s24, 1
      %s26 = scalar_select %p25, 0, %s24
      %s27 = sadd.s32 1, %s18
      %s28 = scalar_select %p25, %s27, %s18
      %p29 = scmp.ge.s32.totalorder %s28, 2
      %s30 = scalar_select %p29, 0, %s28
      %s31 = ssub.s32 %s18, %s30
      %s32 = ssub.s32 %s19, %s26
      %s33 = sor.u32 %s31, %s32
      %p34 = scmp.eq.s32.totalorder %s33, 0
      %s36 = sadd.s32 %s35, 1
      %s37 = scalar_select %p34, %s35, %s36
      %p40 = pneg %p34
      %p41 = scmp.eq.s32.totalorder %s11, 1
      %p42 = por %p40, %p41
      %p43 = scmp.ne.s32.totalorder %s35, %s38
      %p44 = scmp.eq.s32.totalorder %s11, 0
      %p45 = por %p43, %p44
      %p46 = scmp.ne.s32.totalorder %s35, %s38
      %p47 = scmp.eq.s32.totalorder %s16, 1
      %p48 = por %p46, %p47
      %p49 = scmp.ne.s32.totalorder %s38, %s39
      %p50 = scmp.eq.s32.totalorder %s16, 0
      %p51 = por %p49, %p50
      %p52 = scmp.ne.s32.totalorder %s38, %s39
      %p53 = scmp.eq.s32.totalorder %s17, 1
      %p54 = por %p52, %p53
      %p56 = scmp.ne.s32.totalorder %s39, %s55
      %p57 = scmp.eq.s32.totalorder %s17, 0
      %p58 = por %p56, %p57
      %s60 = sadd.s32 %s59, 1
      %p63 = scmp.eq.s32.totalorder %s11, 1
      %p64 = scmp.ne.s32.totalorder %s59, %s61
      %p65 = scmp.eq.s32.totalorder %s11, 0
      %p66 = por %p64, %p65
      %p67 = scmp.ne.s32.totalorder %s59, %s61
      %p68 = scmp.eq.s32.totalorder %s16, 1
      %p69 = por %p67, %p68
      %p70 = scmp.ne.s32.totalorder %s61, %s62
      %p71 = scmp.eq.s32.totalorder %s16, 0
      %p72 = por %p70, %p71
      %p73 = scmp.ne.s32.totalorder %s61, %s62
      %p74 = scmp.eq.s32.totalorder %s17, 1
      %p75 = por %p73, %p74
      %p77 = scmp.ne.s32.totalorder %s62, %s76
      %p78 = scmp.eq.s32.totalorder %s17, 0
      %p79 = por %p77, %p78
      %s80 = ssub.s32 %s18, %s30
      %s81 = ssub.s32 %s19, %s26
      %s82 = sor.u32 %s80, %s81
      %p83 = scmp.eq.s32.totalorder %s82, 0
      %s85 = sadd.s32 %s84, 1
      %s86 = scalar_select %p83, %s84, %s85
      %p89 = pneg %p83
      %p90 = scmp.eq.s32.totalorder %s11, 1
      %p91 = por %p89, %p90
      %p92 = scmp.ne.s32.totalorder %s84, %s87
      %p93 = scmp.eq.s32.totalorder %s11, 0
      %p94 = por %p92, %p93
      %p95 = scmp.ne.s32.totalorder %s84, %s87
      %p96 = scmp.eq.s32.totalorder %s16, 1
      %p97 = por %p95, %p96
      %p98 = scmp.ne.s32.totalorder %s87, %s88
      %p99 = scmp.eq.s32.totalorder %s16, 0
      %p100 = por %p98, %p99
      %p101 = scmp.ne.s32.totalorder %s87, %s88
      %p102 = scmp.eq.s32.totalorder %s17, 1
      %p103 = por %p101, %p102
      %p105 = scmp.ne.s32.totalorder %s88, %s104
      %p106 = scmp.eq.s32.totalorder %s17, 0
      %p107 = por %p105, %p106
      %p108 = scmp.le.s32.totalorder 1, %s11
      %p109 = scmp.lt.s32.totalorder %s11, 3
      %p110 = pnand %p108, %p109
      %p111 = pneg %p110
      // Predicated region
      $region9: #{tpu_custom_call.1} parent=5 // pred_check
        _
      $region10: #{tpu_custom_call.1} parent=5 // pred_check_branch
        %113 = sbr.rel (%p110) target = $region12
      $region11: #{tpu_custom_call.1} parent=5 // pred_region
        %s114 = ssub.s32 %s11, 1
        // Predicated region
        $region13: #{tpu_custom_call.1} parent=11 // pred_check
          %p115 = pneg %p72
        $region14: #{tpu_custom_call.1} parent=11 // pred_check_branch
          %117 = sbr.rel (%p115) target = $region16
        $region15: #{tpu_custom_call.1} parent=11 // pred_region
          _
        $region16: #{tpu_custom_call.1} parent=11 // pred_fallthru
          _
      $region12: #{tpu_custom_call.1} parent=5 // pred_fallthru
        _
      %p118 = scmp.lt.s32.totalorder %s11, 2
      // Predicated region
      $region17: #{tpu_custom_call.1} parent=5 // pred_check
        %p119 = pneg %p118
      $region18: #{tpu_custom_call.1} parent=5 // pred_check_branch
        %121 = sbr.rel (%p119) target = $region20
      $region19: #{tpu_custom_call.1} parent=5 // pred_region
        // Predicated region
        $region21: #{tpu_custom_call.1} parent=19 // pred_check
          %p122 = pneg %p45
        $region22: #{tpu_custom_call.1} parent=19 // pred_check_branch
          %124 = sbr.rel (%p122) target = $region24
        $region23: #{tpu_custom_call.1} parent=19 // pred_region
          %s125 = smul.u32 32, %s19
          %p126 = scmp.lt.s32.totalorder %s18, 1
          %s127 = scalar_select %p126, %s18, 1
          %p128 = scmp.lt.s32.totalorder %s125, 31
          %s129 = scalar_select %p128, %s125, 31
          %s130 = smul.addr %s127, 32
          %s131 = sadd.s32 %s129, %s130
          %s132 = smul.addr %s131, 8
          %s133 = scalar_lea.vmem %s0, %s132
          %s134 = smul.u32 32, %s19
        $region24: #{tpu_custom_call.1} parent=19 // pred_fallthru
          _
      $region20: #{tpu_custom_call.1} parent=5 // pred_fallthru
        _
      %p135 = scmp.le.s32.totalorder 1, %s11
      %p136 = scmp.lt.s32.totalorder %s11, 3
      %p137 = pnand %p135, %p136
      %p138 = pneg %p137
      // Predicated region
      $region25: #{tpu_custom_call.1} parent=5 // pred_check
        _
      $region26: #{tpu_custom_call.1} parent=5 // pred_check_branch
        %140 = sbr.rel (%p137) target = $region28
      $region27: #{tpu_custom_call.1} parent=5 // pred_region
        %s141 = ssub.s32 %s11, 1
        %s142 = smul.u32 32, %s21
        %p143 = scmp.lt.s32.totalorder %s20, 1
        %s144 = scalar_select %p143, %s20, 1
        %p145 = scmp.lt.s32.totalorder %s142, 31
        %s146 = scalar_select %p145, %s142, 31
        %s147 = smul.addr %s144, 32
        %s148 = sadd.s32 %s146, %s147
        %s149 = smul.addr %s148, 8
        %s150 = scalar_lea.vmem %s0, %s149
        %p151 = pneg %p51
        %p152 = pneg %p48
        %p153 = pneg %p72
        %p154 = pneg %p69
        %p155 = pneg %p100
        %p156 = pneg %p97
        %s157 = sand.u32 %s87, 1
        %s158 = scalar_lea.sflag [#allocation3], %s157
        %s159 = sand.u32 %s87, 1
        %s160 = smul.addr %s159, 16
        %s161 = scalar_lea.vmem [#allocation2], %s160
        %s162 = smul.u32 32, %s21
        %p163 = scmp.lt.s32.totalorder %s20, 1
        %s164 = scalar_select %p163, %s20, 1
        %p165 = scmp.lt.s32.totalorder %s162, 31
        %s166 = scalar_select %p165, %s162, 31
        %s167 = smul.addr %s164, 32
        %s168 = sadd.s32 %s166, %s167
        %s169 = smul.addr %s168, 8
        %s170 = scalar_lea.vmem %s0, %s169
        %s171 = smul.u32 32, %s21
        %s172 = smul.u32 2, %s21
        %v173 = vld [vmem:[%s170] sm:$0xff]
        %v174 = vld [vmem:[%s170 + $0x8] sm:$0xff]
        %v175 = vld [vmem:[%s170 + $0x10] sm:$0xff]
        %v176 = vld [vmem:[%s170 + $0x18] sm:$0xff]
        %v177 = vld [vmem:[%s170 + $0x20] sm:$0xff]
        %v178 = vld [vmem:[%s170 + $0x28] sm:$0xff]
        %v179 = vld [vmem:[%s170 + $0x30] sm:$0xff]
        %v180 = vld [vmem:[%s170 + $0x38] sm:$0xff]
        %v181 = vld [vmem:[%s170 + $0x40] sm:$0xff]
        %v182 = vld [vmem:[%s170 + $0x48] sm:$0xff]
        %v183 = vld [vmem:[%s170 + $0x50] sm:$0xff]
        %v184 = vld [vmem:[%s170 + $0x58] sm:$0xff]
        %v185 = vld [vmem:[%s170 + $0x60] sm:$0xff]
        %v186 = vld [vmem:[%s170 + $0x68] sm:$0xff]
        %v187 = vld [vmem:[%s170 + $0x70] sm:$0xff]
        %v188 = vld [vmem:[%s170 + $0x78] sm:$0xff]
        %v189 = vld [vmem:[%s170 + $0x80] sm:$0xff]
        %v190 = vld [vmem:[%s170 + $0x88] sm:$0xff]
        %v191 = vld [vmem:[%s170 + $0x90] sm:$0xff]
        %v192 = vld [vmem:[%s170 + $0x98] sm:$0xff]
        %v193 = vld [vmem:[%s170 + $0xa0] sm:$0xff]
        %v194 = vld [vmem:[%s170 + $0xa8] sm:$0xff]
        %v195 = vld [vmem:[%s170 + $0xb0] sm:$0xff]
        %v196 = vld [vmem:[%s170 + $0xb8] sm:$0xff]
        %v197 = vld [vmem:[%s170 + $0xc0] sm:$0xff]
        %v198 = vld [vmem:[%s170 + $0xc8] sm:$0xff]
        %v199 = vld [vmem:[%s170 + $0xd0] sm:$0xff]
        %v200 = vld [vmem:[%s170 + $0xd8] sm:$0xff]
        %v201 = vld [vmem:[%s170 + $0xe0] sm:$0xff]
        %v202 = vld [vmem:[%s170 + $0xe8] sm:$0xff]
        %v203 = vld [vmem:[%s170 + $0xf0] sm:$0xff]
        %v204 = vld [vmem:[%s170 + $0xf8] sm:$0xff]
        %v205 = vld [vmem:[%s1] sm:$0xff]
        %vm206 = vcmask 523264
        %v208 = vsel %vm206, %v205, 0
        %v211 = vsel %vm206, %v173, 0
        %v214 = vsel %vm206, %v174, 0
        %v217 = vsel %vm206, %v175, 0
        %v220 = vsel %vm206, %v176, 0
        %v223 = vsel %vm206, %v177, 0
        %v226 = vsel %vm206, %v178, 0
        %v229 = vsel %vm206, %v179, 0
        %v232 = vsel %vm206, %v180, 0
        %v235 = vsel %vm206, %v181, 0
        %v238 = vsel %vm206, %v182, 0
        %v241 = vsel %vm206, %v183, 0
        %v244 = vsel %vm206, %v184, 0
        %v247 = vsel %vm206, %v185, 0
        %v250 = vsel %vm206, %v186, 0
        %v253 = vsel %vm206, %v187, 0
        %v256 = vsel %vm206, %v188, 0
        %v259 = vsel %vm206, %v189, 0
        %v262 = vsel %vm206, %v190, 0
        %v265 = vsel %vm206, %v191, 0
        %v268 = vsel %vm206, %v192, 0
        %v271 = vsel %vm206, %v193, 0
        %v274 = vsel %vm206, %v194, 0
        %v277 = vsel %vm206, %v195, 0
        %v280 = vsel %vm206, %v196, 0
        %v283 = vsel %vm206, %v197, 0
        %v286 = vsel %vm206, %v198, 0
        %v289 = vsel %vm206, %v199, 0
        %v292 = vsel %vm206, %v200, 0
        %v295 = vsel %vm206, %v201, 0
        %v298 = vsel %vm206, %v202, 0
        %v301 = vsel %vm206, %v203, 0
        %v304 = vsel %vm206, %v204, 0
        %306 = vmatprep.subr.mxu0 0.0
        %307 = vmatpush1.xpose.msra.mxu0 %v211
        %308 = vmatprep.subr.mxu0 0.0
        %309 = vmatpush1.xpose.msra.mxu0 %v214
        %310 = vmatprep.subr.mxu0 0.0
        %311 = vmatpush1.xpose.msra.mxu0 %v217
        %312 = vmatprep.subr.mxu0 0.0
        %313 = vmatpush1.xpose.msra.mxu0 %v220
        %314 = vmatprep.subr.mxu0 0.0
        %315 = vmatpush1.xpose.msra.mxu0 %v223
        %316 = vmatprep.subr.mxu0 0.0
        %317 = vmatpush1.xpose.msra.mxu0 %v226
        %318 = vmatprep.subr.mxu0 0.0
        %319 = vmatpush1.xpose.msra.mxu0 %v229
        %320 = vmatprep.subr.mxu0 0.0
        %321 = vmatpush1.xpose.msra.mxu0 %v232
        %322 = vmatprep.subr.mxu0 0.0
        %323 = vmatpush1.xpose.msra.mxu0 %v235
        %324 = vmatprep.subr.mxu0 0.0
        %325 = vmatpush1.xpose.msra.mxu0 %v238
        %326 = vmatprep.subr.mxu0 0.0
        %327 = vmatpush1.xpose.msra.mxu0 %v241
        %328 = vmatprep.subr.mxu0 0.0
        %329 = vmatpush1.xpose.msra.mxu0 %v244
        %330 = vmatprep.subr.mxu0 0.0
        %331 = vmatpush1.xpose.msra.mxu0 %v247
        %332 = vmatprep.subr.mxu0 0.0
        %333 = vmatpush1.xpose.msra.mxu0 %v250
        %334 = vmatprep.subr.mxu0 0.0
        %335 = vmatpush1.xpose.msra.mxu0 %v253
        %336 = vmatprep.subr.mxu0 0.0
        %337 = vmatpush1.xpose.msra.mxu0 %v256
        %338 = vmatprep.subr.mxu0 0.0
        %339 = vmatpush1.xpose.msra.mxu0 %v259
        %340 = vmatprep.subr.mxu0 0.0
        %341 = vmatpush1.xpose.msra.mxu0 %v262
        %342 = vmatprep.subr.mxu0 0.0
        %343 = vmatpush1.xpose.msra.mxu0 %v265
        %344 = vmatprep.subr.mxu0 0.0
        %345 = vmatpush1.xpose.msra.mxu0 %v268
        %346 = vmatprep.subr.mxu0 0.0
        %347 = vmatpush1.xpose.msra.mxu0 %v271
        %348 = vmatprep.subr.mxu0 0.0
        %349 = vmatpush1.xpose.msra.mxu0 %v274
        %350 = vmatprep.subr.mxu0 0.0
        %351 = vmatpush1.xpose.msra.mxu0 %v277
        %352 = vmatprep.subr.mxu0 0.0
        %353 = vmatpush1.xpose.msra.mxu0 %v280
        %354 = vmatprep.subr.mxu0 0.0
        %355 = vmatpush1.xpose.msra.mxu0 %v283
        %356 = vmatprep.subr.mxu0 0.0
        %357 = vmatpush1.xpose.msra.mxu0 %v286
        %358 = vmatprep.subr.mxu0 0.0
        %359 = vmatpush1.xpose.msra.mxu0 %v289
        %360 = vmatprep.subr.mxu0 0.0
        %361 = vmatpush1.xpose.msra.mxu0 %v292
        %362 = vmatprep.subr.mxu0 0.0
        %363 = vmatpush1.xpose.msra.mxu0 %v295
        %364 = vmatprep.subr.mxu0 0.0
        %365 = vmatpush1.xpose.msra.mxu0 %v298
        %366 = vmatprep.subr.mxu0 0.0
        %367 = vmatpush1.xpose.msra.mxu0 %v301
        %368 = vmatprep.subr.mxu0 0.0
        %369 = vmatpush1.xpose.msra.mxu0 %v304
        %370 = vmatprep.mubr.f32.mxu0 0.0
        %371 = vmatmul.mubr.f32.gmra.mrb[0].mxu0 %v208
        %v372 = vpop.f32.mrb[0].mxu0
        %v373 = vadd.f32 0.0, %v372
        %v374 = vpop.f32.mrb[0].mxu0
        %v375 = vadd.f32 0.0, %v374
        %376 = vdwg.mxu0
        %377 = vst [vmem:[%s161] sm:$0xff] %v373
        %378 = vst [vmem:[%s161 + $0x8] sm:$0xff] %v375
        %s379 = sand.u32 %s87, 1
        %s380 = scalar_lea.sflag [#allocation3], %s379
        %s381 = sand.u32 %s87, 1
        %s382 = smul.addr %s381, 16
        %s383 = scalar_lea.vmem [#allocation2], %s382
        // Predicated region
        $region29: #{tpu_custom_call.1} parent=27 // pred_check
          %p384 = pneg %p97
        $region30: #{tpu_custom_call.1} parent=27 // pred_check_branch
          %386 = sbr.rel (%p384) target = $region32
        $region31: #{tpu_custom_call.1} parent=27 // pred_region
          %s387 = smul.u32 2, %s21
          %s389 = ssub.s32 256, 256
          %390 = vsyncadd %s380, %s389
          %s391 = smul.addr %s20, 2
          %s392 = sadd.s32 %s387, %s391
          %s393 = smul.addr %s392, 128
          %s394 = scalar_lea.hbm %s2, %s393
          %s396 = sshll.u32 %s383, 4
          %s397 = int_to_ptr.vmem [resolvable:$true] %s396
          %399 = dma.vmem_to_hbm [thread:$0]  %s397, 256, %s394, %s380
        $region32: #{tpu_custom_call.1} parent=27 // pred_fallthru
          _
      $region28: #{tpu_custom_call.1} parent=5 // pred_fallthru
        _
      %p400 = scmp.le.s32.totalorder 2, %s11
      // Predicated region
      $region33: #{tpu_custom_call.1} parent=5 // pred_check
        %p401 = pneg %p400
      $region34: #{tpu_custom_call.1} parent=5 // pred_check_branch
        %403 = sbr.rel (%p401) target = $region36
      $region35: #{tpu_custom_call.1} parent=5 // pred_region
        %s404 = ssub.s32 %s11, 2
        // Predicated region
        $region37: #{tpu_custom_call.1} parent=35 // pred_check
          %p405 = pneg %p103
        $region38: #{tpu_custom_call.1} parent=35 // pred_check_branch
          %407 = sbr.rel (%p405) target = $region40
        $region39: #{tpu_custom_call.1} parent=35 // pred_region
          %s408 = sand.u32 %s88, 1
          %s409 = scalar_lea.sflag [#allocation3], %s408
          %s410 = sand.u32 %s88, 1
          %s411 = smul.addr %s410, 16
          %s412 = scalar_lea.vmem [#allocation2], %s411
          %413 = dma.done %s409, 256
        $region40: #{tpu_custom_call.1} parent=35 // pred_fallthru
          _
      $region36: #{tpu_custom_call.1} parent=5 // pred_fallthru
        _
    $region6: #{tpu_custom_call.1} parent=1 // loop_footer
      %s15 = sadd.s32 1, %s11
    $region7: #{tpu_custom_call.1} parent=1 // loop_footer_branch
      %10 = sbr.rel target = $region3
    $region8: #{tpu_custom_call.1} parent=1 // loop_exit
      _
    %414 = vsyncpa [#allocation3], 1
    %s415 = scalar_lea.sflag [#allocation3], 1
    %416 = vsyncpa %s415, 1

</llo_original>
